<compile_context>
chip_gen: v5e
topology: v5e:2x2
jax: 0.10.0
libtpu: 0.0.40
codegen_flags: <defaults>
</compile_context>

<pallas_src>
import jax
import jax.numpy as jnp
from jax.experimental import pallas as pl
from jax.experimental.pallas import tpu as pltpu


def _round_up(x, m):
    return ((x + m - 1) // m) * m


# ----------------------------- Pallas kernel -------------------------------

def _make_kernel(n_comp, dims, out_size):
    """Fused HieLinFusion kernel for a fixed component structure."""
    n_steps = n_comp - 1
    # Hidden width of step j (PyTorch: multiplier*input_size_all[j+1]; last: out_size).
    hs = [dims[j + 1] if j < n_steps - 1 else out_size for j in range(n_steps)]

    def kernel(*refs):
        # refs layout:
        #   x_0 .. x_{n_comp-1}                      component inputs (TB, D_j)
        #   per step j: wa (D_j, H_j+1), wb (D_{j+1}, H_j+1), lb (1, H_j+1)
        #               (comp head already folded in as the last column)
        #   res_ref                                   (TB, out_size + n_steps)
        x_refs = refs[:n_comp]
        p_refs = refs[n_comp:n_comp + 3 * n_steps]
        res_ref = refs[n_comp + 3 * n_steps]

        o = x_refs[0][...].astype(jnp.float32)                     # (TB, D0)
        for j in range(n_steps):
            wa_ref, wb_ref, lb_ref = p_refs[3 * j:3 * j + 3]
            xj = x_refs[j + 1][...].astype(jnp.float32)            # (TB, D_{j+1})
            h = hs[j]

            # linears[j](cat(o, x_{j+1})) with the comp head folded in:
            # split matmul (identical math, no lane concatenation), one extra
            # output column carries CompOuts[j](o) (pre-ReLU, bias cb folded).
            s = (jnp.dot(o, wa_ref[...], preferred_element_type=jnp.float32)
                 + jnp.dot(xj, wb_ref[...], preferred_element_type=jnp.float32)
                 + lb_ref[...])                                    # (TB, h+1)

            # comp_j = last column (pre-ReLU) -> straight into the output slab
            res_ref[:, out_size + j:out_size + j + 1] = (
                s[:, h:h + 1].astype(res_ref.dtype))
            o = jnp.maximum(s[:, :h], 0.0)                         # ReLU (every step)

        res_ref[:, :out_size] = o.astype(res_ref.dtype)            # final o

    return kernel


# ------------------------------- wrapper ------------------------------------

def hie_lin_fusion_forward(out_list, params, out_size, *,
                           block_batch=2048, input_dtype=jnp.bfloat16,
                           min_grid_steps=8):
    """Pallas equivalent of HieLinFusion.forward.

    out_list: list of [B, D_j] arrays (D_j = multiplier * input_size_all[j]).
    Returns (o, Outs): o is [B, out_size]; Outs is a list of [B] arrays.
    block_batch: batch tile (sweep 1024-4096 for large batches).
    input_dtype: HBM dtype for the activations (bf16 halves read traffic;
                 accumulation is always f32 in-kernel).
    """
    n_comp = len(out_list)
    assert n_comp >= 2, "HieLinFusion needs at least two components"
    n_steps = n_comp - 1
    batch = out_list[0].shape[0]
    dims = [int(x.shape[1]) for x in out_list]
    width = out_size + n_steps

    # ---- batch tile: big, but keep >= min_grid_steps grid steps (v7x megacore
    #      needs >= 2 and each core still wants steps to double-buffer) --------
    tb = _round_up(min(block_batch, pl.cdiv(batch, min_grid_steps)), 8)
    padded_batch = _round_up(batch, tb)
    grid = (padded_batch // tb,)

    # ---- pad (so non-divisible batches keep the tiled fast path) + cast ------
    xs = []
    for x in out_list:
        if padded_batch != batch:
            x = jnp.pad(x, ((0, padded_batch - batch), (0, 0)))
        xs.append(x.astype(input_dtype))

    # ---- fold comp heads into the step weights (tiny, wrapper-side) ----------
    fused = []
    for j in range(n_steps):
        p = params["steps"][j]
        wa = jnp.concatenate([p["wa"], p["cw"].T], axis=1)                    # (D_j, H_j+1)
        wb = jnp.concatenate(
            [p["wb"], jnp.zeros((p["wb"].shape[0], 1), p["wb"].dtype)], axis=1)
        lb = jnp.concatenate([p["lb"], p["cb"]], axis=1)                      # (1, H_j+1)
        fused.extend([wa, wb, lb])

    args = xs + fused
    in_specs = ([pl.BlockSpec((tb, d), lambda b: (b, 0)) for d in dims]
                + [pl.BlockSpec(w.shape, lambda b: (0, 0)) for w in fused])

    # ---- VMEM headroom for very large tiles (v5e scoped default is 16 MiB) ---
    est_vmem = (2 * tb * sum(dims) * jnp.dtype(input_dtype).itemsize   # act double-buffers
                + 2 * tb * width * 4                                   # output double-buffer
                + 2 * sum(int(w.size) for w in fused) * 4              # weights
                + (256 << 10))
    cp_kwargs = dict(dimension_semantics=("parallel",))
    if est_vmem > (12 << 20):
        cp_kwargs["vmem_limit_bytes"] = min(int(est_vmem * 1.5), 100 << 20)

    res = pl.pallas_call(
        _make_kernel(n_comp, dims, out_size),
        grid=grid,
        in_specs=in_specs,
        out_specs=pl.BlockSpec((tb, width), lambda b: (b, 0)),
        out_shape=jax.ShapeDtypeStruct((padded_batch, width), jnp.float32),
        compiler_params=pltpu.CompilerParams(**cp_kwargs),
    )(*args)

    res = res[:batch]
    o = res[:, :out_size]                                   # torch does not squeeze o
    outs = [res[:, out_size + j] for j in range(n_steps)]   # each [B]
    return o, outs


# ------------------------------ param init ----------------------------------

def init_params(key, input_size_all, out_size, bidirectional=True,
                hidden_size=None, useExtralin=False):
    """Parameters for HieLinFusion (hidden_size/useExtralin unused, as in torch).

    linears[j] weights are stored split+transposed:
        wa: (D_j, H_j)     == W[:, :D_j].T      (H_j = D_{j+1}; last: out_size)
        wb: (D_{j+1}, H_j) == W[:, D_j:].T
    CompOuts[j]: cw (1, D_j), cb (1, 1).
    """
    del hidden_size, useExtralin
    mult = 2 if bidirectional else 1
    dims = [mult * s for s in input_size_all]
    n_steps = len(input_size_all) - 1
    keys = jax.random.split(key, 5 * n_steps)
    scale = 0.1
    steps = []
    for j in range(n_steps):
        d_in, d_nxt = dims[j], dims[j + 1]
        h = d_nxt if j < n_steps - 1 else out_size
        k = keys[5 * j:5 * j + 5]
        steps.append(dict(
            wa=scale * jax.random.normal(k[0], (d_in, h), jnp.float32),
            wb=scale * jax.random.normal(k[1], (d_nxt, h), jnp.float32),
            lb=scale * jax.random.normal(k[2], (1, h), jnp.float32),
            cw=scale * jax.random.normal(k[3], (1, d_in), jnp.float32),
            cb=scale * jax.random.normal(k[4], (1, 1), jnp.float32),
        ))
    return dict(steps=steps, dims=dims)


# ---------------------- pure-JAX reference (torch-style) --------------------

def _reference(out_list, params):
    o = out_list[0]
    outs = []
    for j, p in enumerate(params["steps"]):
        outs.append(o @ p["cw"][0] + p["cb"][0, 0])            # CompOuts[j](o).squeeze(-1)
        w_full = jnp.concatenate([p["wa"], p["wb"]], axis=0)   # cat-form Linear weight
        cat = jnp.concatenate([o, out_list[j + 1]], axis=-1)
        o = jnp.maximum(cat @ w_full + p["lb"][0], 0.0)
    return o, outs


if __name__ == "__main__":
    # Small, module-consistent shapes:
    #   input_size_all = [16, 12, 8, 8], bidirectional -> D = [32, 24, 16, 16]
    #   out_size = 1, batch = 200 (not a multiple of the tile -> exercises the
    #   padded / tiled fast path instead of the old full-batch fallback).
    input_size_all = [16, 12, 8, 8]
    out_size = 1
    batch = 200

    key = jax.random.PRNGKey(0)
    pkey, xkey = jax.random.split(key)
    params = init_params(pkey, input_size_all, out_size, bidirectional=True)
    dims = params["dims"]

    xkeys = jax.random.split(xkey, len(dims))
    out_list = [jax.random.normal(xkeys[i], (batch, dims[i]), jnp.float32)
                for i in range(len(dims))]

    o_ref, outs_ref = _reference(out_list, params)

    # --- f32-input path (tight check vs the torch-structured reference) ------
    o32, outs32 = hie_lin_fusion_forward(out_list, params, out_size,
                                         input_dtype=jnp.float32)
    o32 = jax.block_until_ready(o32)
    outs32 = [jax.block_until_ready(x) for x in outs32]
    assert o32.shape == (batch, out_size)
    assert jnp.allclose(o32, o_ref, atol=2e-2, rtol=2e-2)
    assert len(outs32) == len(input_size_all) - 1
    for a, b in zip(outs32, outs_ref):
        assert a.shape == (batch,)
        assert jnp.allclose(a, b, atol=2e-2, rtol=2e-2)

    # --- bf16-input path (default; halves HBM reads; ~1e-2-level deviation) --
    obf, outsbf = hie_lin_fusion_forward(out_list, params, out_size,
                                         input_dtype=jnp.bfloat16)
    obf = jax.block_until_ready(obf)
    outsbf = [jax.block_until_ready(x) for x in outsbf]
    assert jnp.allclose(obf, o_ref, atol=6e-2, rtol=6e-2)
    for a, b in zip(outsbf, outs_ref):
        assert jnp.allclose(a, b, atol=6e-2, rtol=6e-2)

    print("KERNEL_OK")
</pallas_src>

<mosaic_0001>
module attributes {stable_mosaic.version = 11 : i64} {
  func.func @kernel(%arg0: i32, %arg1: memref<32x32xf32, #tpu.memory_space<vmem>>, %arg2: memref<32x24xf32, #tpu.memory_space<vmem>>, %arg3: memref<32x16xf32, #tpu.memory_space<vmem>>, %arg4: memref<32x16xf32, #tpu.memory_space<vmem>>, %arg5: memref<32x25xf32, #tpu.memory_space<vmem>>, %arg6: memref<24x25xf32, #tpu.memory_space<vmem>>, %arg7: memref<1x25xf32, #tpu.memory_space<vmem>>, %arg8: memref<24x17xf32, #tpu.memory_space<vmem>>, %arg9: memref<16x17xf32, #tpu.memory_space<vmem>>, %arg10: memref<1x17xf32, #tpu.memory_space<vmem>>, %arg11: memref<16x2xf32, #tpu.memory_space<vmem>>, %arg12: memref<16x2xf32, #tpu.memory_space<vmem>>, %arg13: memref<1x2xf32, #tpu.memory_space<vmem>>, %arg14: memref<32x4xf32, #tpu.memory_space<vmem>>) attributes {dimension_semantics = [#tpu.dimension_semantics<parallel>], iteration_bounds = array<i64: 7>, scalar_prefetch = 0 : i64, scratch_operands = 0 : i64, tpu.core_type = #tpu.core_type<tc>, window_params = [{transform_indices = @transform_0, window_bounds = array<i64: 32, 32>}, {transform_indices = @transform_1, window_bounds = array<i64: 32, 24>}, {transform_indices = @transform_2, window_bounds = array<i64: 32, 16>}, {transform_indices = @transform_3, window_bounds = array<i64: 32, 16>}, {pipeline_mode = #tpu.pipeline_mode<synchronous>, transform_indices = @transform_4, window_bounds = array<i64: 32, 25>}, {pipeline_mode = #tpu.pipeline_mode<synchronous>, transform_indices = @transform_5, window_bounds = array<i64: 24, 25>}, {pipeline_mode = #tpu.pipeline_mode<synchronous>, transform_indices = @transform_6, window_bounds = array<i64: 1, 25>}, {pipeline_mode = #tpu.pipeline_mode<synchronous>, transform_indices = @transform_7, window_bounds = array<i64: 24, 17>}, {pipeline_mode = #tpu.pipeline_mode<synchronous>, transform_indices = @transform_8, window_bounds = array<i64: 16, 17>}, {pipeline_mode = #tpu.pipeline_mode<synchronous>, transform_indices = @transform_9, window_bounds = array<i64: 1, 17>}, {pipeline_mode = #tpu.pipeline_mode<synchronous>, transform_indices = @transform_10, window_bounds = array<i64: 16, 2>}, {pipeline_mode = #tpu.pipeline_mode<synchronous>, transform_indices = @transform_11, window_bounds = array<i64: 16, 2>}, {pipeline_mode = #tpu.pipeline_mode<synchronous>, transform_indices = @transform_12, window_bounds = array<i64: 1, 2>}, {transform_indices = @transform_13, window_bounds = array<i64: 32, 4>}]} {
    %c0 = arith.constant 0 : index
    %c0_0 = arith.constant 0 : index
    %0 = vector.load %arg1[%c0, %c0_0] : memref<32x32xf32, #tpu.memory_space<vmem>>, vector<32x32xf32>
    %c0_1 = arith.constant 0 : index
    %c0_2 = arith.constant 0 : index
    %1 = vector.load %arg2[%c0_1, %c0_2] : memref<32x24xf32, #tpu.memory_space<vmem>>, vector<32x24xf32>
    %c0_3 = arith.constant 0 : index
    %c0_4 = arith.constant 0 : index
    %2 = vector.load %arg5[%c0_3, %c0_4] : memref<32x25xf32, #tpu.memory_space<vmem>>, vector<32x25xf32>
    %cst = arith.constant dense<0.000000e+00> : vector<32x25xf32>
    %3 = tpu.matmul %0, %2, %cst {dimension_numbers = #tpu.dot_dimension_numbers<[1], [0], [0], [1], [0, 0, 1, 1], [], []>} : vector<32x32xf32>, vector<32x25xf32>, vector<32x25xf32> -> vector<32x25xf32>
    %c0_5 = arith.constant 0 : index
    %c0_6 = arith.constant 0 : index
    %4 = vector.load %arg6[%c0_5, %c0_6] : memref<24x25xf32, #tpu.memory_space<vmem>>, vector<24x25xf32>
    %cst_7 = arith.constant dense<0.000000e+00> : vector<32x25xf32>
    %5 = tpu.matmul %1, %4, %cst_7 {dimension_numbers = #tpu.dot_dimension_numbers<[1], [0], [0], [1], [0, 0, 1, 1], [], []>} : vector<32x24xf32>, vector<24x25xf32>, vector<32x25xf32> -> vector<32x25xf32>
    %6 = arith.addf %3, %5 : vector<32x25xf32>
    %c0_8 = arith.constant 0 : index
    %c0_9 = arith.constant 0 : index
    %7 = vector.load %arg7[%c0_8, %c0_9] : memref<1x25xf32, #tpu.memory_space<vmem>>, vector<1x25xf32>
    %8 = vector.broadcast %7 : vector<1x25xf32> to vector<32x25xf32>
    %9 = arith.addf %6, %8 : vector<32x25xf32>
    %10 = vector.extract_strided_slice %9 {offsets = [0, 24], sizes = [32, 1], strides = [1, 1]} : vector<32x25xf32> to vector<32x1xf32>
    %c0_10 = arith.constant 0 : index
    %c1 = arith.constant 1 : index
    %11 = vector.load %arg14[%c0_10, %c1] : memref<32x4xf32, #tpu.memory_space<vmem>>, vector<32x1xf32>
    tpu.vector_store %arg14[%c0_10, %c1], %10 {strides = array<i32>} : memref<32x4xf32, #tpu.memory_space<vmem>>, vector<32x1xf32>,
    %12 = vector.extract_strided_slice %9 {offsets = [0, 0], sizes = [32, 24], strides = [1, 1]} : vector<32x25xf32> to vector<32x24xf32>
    %cst_11 = arith.constant 0.000000e+00 : f32
    %13 = vector.broadcast %cst_11 : f32 to vector<32x24xf32>
    %14 = arith.maximumf %12, %13 : vector<32x24xf32>
    %c0_12 = arith.constant 0 : index
    %c0_13 = arith.constant 0 : index
    %15 = vector.load %arg3[%c0_12, %c0_13] : memref<32x16xf32, #tpu.memory_space<vmem>>, vector<32x16xf32>
    %c0_14 = arith.constant 0 : index
    %c0_15 = arith.constant 0 : index
    %16 = vector.load %arg8[%c0_14, %c0_15] : memref<24x17xf32, #tpu.memory_space<vmem>>, vector<24x17xf32>
    %cst_16 = arith.constant dense<0.000000e+00> : vector<32x17xf32>
    %17 = tpu.matmul %14, %16, %cst_16 {dimension_numbers = #tpu.dot_dimension_numbers<[1], [0], [0], [1], [0, 0, 1, 1], [], []>} : vector<32x24xf32>, vector<24x17xf32>, vector<32x17xf32> -> vector<32x17xf32>
    %c0_17 = arith.constant 0 : index
    %c0_18 = arith.constant 0 : index
    %18 = vector.load %arg9[%c0_17, %c0_18] : memref<16x17xf32, #tpu.memory_space<vmem>>, vector<16x17xf32>
    %cst_19 = arith.constant dense<0.000000e+00> : vector<32x17xf32>
    %19 = tpu.matmul %15, %18, %cst_19 {dimension_numbers = #tpu.dot_dimension_numbers<[1], [0], [0], [1], [0, 0, 1, 1], [], []>} : vector<32x16xf32>, vector<16x17xf32>, vector<32x17xf32> -> vector<32x17xf32>
    %20 = arith.addf %17, %19 : vector<32x17xf32>
    %c0_20 = arith.constant 0 : index
    %c0_21 = arith.constant 0 : index
    %21 = vector.load %arg10[%c0_20, %c0_21] : memref<1x17xf32, #tpu.memory_space<vmem>>, vector<1x17xf32>
    %22 = vector.broadcast %21 : vector<1x17xf32> to vector<32x17xf32>
    %23 = arith.addf %20, %22 : vector<32x17xf32>
    %24 = vector.extract_strided_slice %23 {offsets = [0, 16], sizes = [32, 1], strides = [1, 1]} : vector<32x17xf32> to vector<32x1xf32>
    %c0_22 = arith.constant 0 : index
    %c2 = arith.constant 2 : index
    %25 = vector.load %arg14[%c0_22, %c2] : memref<32x4xf32, #tpu.memory_space<vmem>>, vector<32x1xf32>
    tpu.vector_store %arg14[%c0_22, %c2], %24 {strides = array<i32>} : memref<32x4xf32, #tpu.memory_space<vmem>>, vector<32x1xf32>,
    %26 = vector.extract_strided_slice %23 {offsets = [0, 0], sizes = [32, 16], strides = [1, 1]} : vector<32x17xf32> to vector<32x16xf32>
    %cst_23 = arith.constant 0.000000e+00 : f32
    %27 = vector.broadcast %cst_23 : f32 to vector<32x16xf32>
    %28 = arith.maximumf %26, %27 : vector<32x16xf32>
    %c0_24 = arith.constant 0 : index
    %c0_25 = arith.constant 0 : index
    %29 = vector.load %arg4[%c0_24, %c0_25] : memref<32x16xf32, #tpu.memory_space<vmem>>, vector<32x16xf32>
    %c0_26 = arith.constant 0 : index
    %c0_27 = arith.constant 0 : index
    %30 = vector.load %arg11[%c0_26, %c0_27] : memref<16x2xf32, #tpu.memory_space<vmem>>, vector<16x2xf32>
    %cst_28 = arith.constant dense<0.000000e+00> : vector<32x2xf32>
    %31 = tpu.matmul %28, %30, %cst_28 {dimension_numbers = #tpu.dot_dimension_numbers<[1], [0], [0], [1], [0, 0, 1, 1], [], []>} : vector<32x16xf32>, vector<16x2xf32>, vector<32x2xf32> -> vector<32x2xf32>
    %c0_29 = arith.constant 0 : index
    %c0_30 = arith.constant 0 : index
    %32 = vector.load %arg12[%c0_29, %c0_30] : memref<16x2xf32, #tpu.memory_space<vmem>>, vector<16x2xf32>
    %cst_31 = arith.constant dense<0.000000e+00> : vector<32x2xf32>
    %33 = tpu.matmul %29, %32, %cst_31 {dimension_numbers = #tpu.dot_dimension_numbers<[1], [0], [0], [1], [0, 0, 1, 1], [], []>} : vector<32x16xf32>, vector<16x2xf32>, vector<32x2xf32> -> vector<32x2xf32>
    %34 = arith.addf %31, %33 : vector<32x2xf32>
    %c0_32 = arith.constant 0 : index
    %c0_33 = arith.constant 0 : index
    %35 = vector.load %arg13[%c0_32, %c0_33] : memref<1x2xf32, #tpu.memory_space<vmem>>, vector<1x2xf32>
    %36 = vector.broadcast %35 : vector<1x2xf32> to vector<32x2xf32>
    %37 = arith.addf %34, %36 : vector<32x2xf32>
    %38 = vector.extract_strided_slice %37 {offsets = [0, 1], sizes = [32, 1], strides = [1, 1]} : vector<32x2xf32> to vector<32x1xf32>
    %c0_34 = arith.constant 0 : index
    %c3 = arith.constant 3 : index
    %39 = vector.load %arg14[%c0_34, %c3] : memref<32x4xf32, #tpu.memory_space<vmem>>, vector<32x1xf32>
    tpu.vector_store %arg14[%c0_34, %c3], %38 {strides = array<i32>} : memref<32x4xf32, #tpu.memory_space<vmem>>, vector<32x1xf32>,
    %40 = vector.extract_strided_slice %37 {offsets = [0, 0], sizes = [32, 1], strides = [1, 1]} : vector<32x2xf32> to vector<32x1xf32>
    %cst_35 = arith.constant 0.000000e+00 : f32
    %41 = vector.broadcast %cst_35 : f32 to vector<32x1xf32>
    %42 = arith.maximumf %40, %41 : vector<32x1xf32>
    %c0_36 = arith.constant 0 : index
    %c0_37 = arith.constant 0 : index
    %43 = vector.load %arg14[%c0_36, %c0_37] : memref<32x4xf32, #tpu.memory_space<vmem>>, vector<32x1xf32>
    tpu.vector_store %arg14[%c0_36, %c0_37], %42 {strides = array<i32>} : memref<32x4xf32, #tpu.memory_space<vmem>>, vector<32x1xf32>,
    return
  }
  func.func @transform_0(%arg0: i32) -> (i32, i32) {
    %c0_i32 = arith.constant 0 : i32
    %c0_i32_0 = arith.constant 0 : i32
    return %arg0, %c0_i32 : i32, i32
  }
  func.func @transform_1(%arg0: i32) -> (i32, i32) {
    %c0_i32 = arith.constant 0 : i32
    %c0_i32_0 = arith.constant 0 : i32
    return %arg0, %c0_i32 : i32, i32
  }
  func.func @transform_2(%arg0: i32) -> (i32, i32) {
    %c0_i32 = arith.constant 0 : i32
    %c0_i32_0 = arith.constant 0 : i32
    return %arg0, %c0_i32 : i32, i32
  }
  func.func @transform_3(%arg0: i32) -> (i32, i32) {
    %c0_i32 = arith.constant 0 : i32
    %c0_i32_0 = arith.constant 0 : i32
    return %arg0, %c0_i32 : i32, i32
  }
  func.func @transform_4(%arg0: i32) -> (i32, i32) {
    %c0_i32 = arith.constant 0 : i32
    %c0_i32_0 = arith.constant 0 : i32
    %c0_i32_1 = arith.constant 0 : i32
    return %c0_i32, %c0_i32_0 : i32, i32
  }
  func.func @transform_5(%arg0: i32) -> (i32, i32) {
    %c0_i32 = arith.constant 0 : i32
    %c0_i32_0 = arith.constant 0 : i32
    %c0_i32_1 = arith.constant 0 : i32
    return %c0_i32, %c0_i32_0 : i32, i32
  }
  func.func @transform_6(%arg0: i32) -> (i32, i32) {
    %c0_i32 = arith.constant 0 : i32
    %c0_i32_0 = arith.constant 0 : i32
    %c0_i32_1 = arith.constant 0 : i32
    return %c0_i32, %c0_i32_0 : i32, i32
  }
  func.func @transform_7(%arg0: i32) -> (i32, i32) {
    %c0_i32 = arith.constant 0 : i32
    %c0_i32_0 = arith.constant 0 : i32
    %c0_i32_1 = arith.constant 0 : i32
    return %c0_i32, %c0_i32_0 : i32, i32
  }
  func.func @transform_8(%arg0: i32) -> (i32, i32) {
    %c0_i32 = arith.constant 0 : i32
    %c0_i32_0 = arith.constant 0 : i32
    %c0_i32_1 = arith.constant 0 : i32
    return %c0_i32, %c0_i32_0 : i32, i32
  }
  func.func @transform_9(%arg0: i32) -> (i32, i32) {
    %c0_i32 = arith.constant 0 : i32
    %c0_i32_0 = arith.constant 0 : i32
    %c0_i32_1 = arith.constant 0 : i32
    return %c0_i32, %c0_i32_0 : i32, i32
  }
  func.func @transform_10(%arg0: i32) -> (i32, i32) {
    %c0_i32 = arith.constant 0 : i32
    %c0_i32_0 = arith.constant 0 : i32
    %c0_i32_1 = arith.constant 0 : i32
    return %c0_i32, %c0_i32_0 : i32, i32
  }
  func.func @transform_11(%arg0: i32) -> (i32, i32) {
    %c0_i32 = arith.constant 0 : i32
    %c0_i32_0 = arith.constant 0 : i32
    %c0_i32_1 = arith.constant 0 : i32
    return %c0_i32, %c0_i32_0 : i32, i32
  }
  func.func @transform_12(%arg0: i32) -> (i32, i32) {
    %c0_i32 = arith.constant 0 : i32
    %c0_i32_0 = arith.constant 0 : i32
    %c0_i32_1 = arith.constant 0 : i32
    return %c0_i32, %c0_i32_0 : i32, i32
  }
  func.func @transform_13(%arg0: i32) -> (i32, i32) {
    %c0_i32 = arith.constant 0 : i32
    %c0_i32_0 = arith.constant 0 : i32
    return %arg0, %c0_i32 : i32, i32
  }
}

</mosaic_0001>

<llo_original>
// kernel: tpu_custom_call.1
$region0: #{tpu_custom_call.1}
  #allocation0 [shape = 'u32[]', space=smem, size = 0x4, offset = 0x4, fixed_abs, tag = 'smem constant byte address 0x4 - core index']
  #allocation1 [shape = 'u32[72,128]{1,0:T(1,128)}', space=vmem, size = 0x9000, scoped, tag = 'internal scratch']
  %s0 = inlined_call_operand.vmem [shape: f32[224,32], index: 0, kind: input, shape index: {}]
  %s1 = inlined_call_operand.vmem [shape: f32[224,24], index: 1, kind: input, shape index: {}]
  %s2 = inlined_call_operand.vmem [shape: f32[224,16], index: 2, kind: input, shape index: {}]
  %s3 = inlined_call_operand.vmem [shape: f32[224,16], index: 3, kind: input, shape index: {}]
  %s4 = inlined_call_operand.vmem [shape: f32[32,25], index: 4, kind: input, shape index: {}]
  %s5 = inlined_call_operand.vmem [shape: f32[24,25], index: 5, kind: input, shape index: {}]
  %s6 = inlined_call_operand.vmem [shape: f32[1,25], index: 6, kind: input, shape index: {}]
  %s7 = inlined_call_operand.vmem [shape: f32[24,17], index: 7, kind: input, shape index: {}]
  %s8 = inlined_call_operand.vmem [shape: f32[16,17], index: 8, kind: input, shape index: {}]
  %s9 = inlined_call_operand.vmem [shape: f32[1,17], index: 9, kind: input, shape index: {}]
  %s10 = inlined_call_operand.vmem [shape: f32[16,2], index: 10, kind: input, shape index: {}]
  %s11 = inlined_call_operand.vmem [shape: f32[16,2], index: 11, kind: input, shape index: {}]
  %s12 = inlined_call_operand.vmem [shape: f32[1,2], index: 12, kind: input, shape index: {}]
  %s13 = inlined_call_operand.vmem [shape: f32[224,4], index: 13, kind: output, shape index: {}]
  %s14 = sld [smem:[#allocation0]]
  $region85: #{tpu_custom_call.1} parent=0
    _
  %s16 = ssub.s32 1, %s14
  %s17 = scalar_select 0, %s16, %s14
  loop: start=0, step=1, limit=9
  $region2: #{tpu_custom_call.1} parent=0 // loop_pre_header
    _
  $region3: #{tpu_custom_call.1} parent=0 // loop_header
    %s19 = sphi 0, %s23
    %p20 = scmp.ge.s32.totalorder %s19, 9
    %s29 = sphi 0, %s31
    %s32 = sphi 0, %s29
    %s33 = sphi 0, %s32
    %s49 = sphi 0, %s33
    %s55 = sphi 0, %s57
    %s58 = sphi 0, %s55
    %s59 = sphi 0, %s58
    %s75 = sphi 0, %s59
    %s81 = sphi 0, %s83
    %s84 = sphi 0, %s81
    %s85 = sphi 0, %s84
    %s101 = sphi 0, %s85
    %s107 = sphi 0, %s109
    %s110 = sphi 0, %s107
    %s111 = sphi 0, %s110
    %s127 = sphi 0, %s111
    %s131 = sphi 0, %s131
    %s133 = sphi 0, %s131
    %s134 = sphi 0, %s133
    %s148 = sphi 0, %s134
    %s152 = sphi 0, %s152
    %s154 = sphi 0, %s152
    %s155 = sphi 0, %s154
    %s169 = sphi 0, %s155
    %s173 = sphi 0, %s173
    %s175 = sphi 0, %s173
    %s176 = sphi 0, %s175
    %s190 = sphi 0, %s176
    %s194 = sphi 0, %s194
    %s196 = sphi 0, %s194
    %s197 = sphi 0, %s196
    %s211 = sphi 0, %s197
    %s215 = sphi 0, %s215
    %s217 = sphi 0, %s215
    %s218 = sphi 0, %s217
    %s232 = sphi 0, %s218
    %s236 = sphi 0, %s236
    %s238 = sphi 0, %s236
    %s239 = sphi 0, %s238
    %s253 = sphi 0, %s239
    %s257 = sphi 0, %s257
    %s259 = sphi 0, %s257
    %s260 = sphi 0, %s259
    %s274 = sphi 0, %s260
    %s278 = sphi 0, %s278
    %s280 = sphi 0, %s278
    %s281 = sphi 0, %s280
    %s295 = sphi 0, %s281
    %s299 = sphi 0, %s299
    %s301 = sphi 0, %s299
    %s302 = sphi 0, %s301
    %s316 = sphi 0, %s302
    %s322 = sphi 0, %s324
    %s325 = sphi 0, %s322
    %s326 = sphi 0, %s325
    %s342 = sphi 0, %s326
  $region4: #{tpu_custom_call.1} parent=0 // loop_header_branch
    %22 = sbr.rel (%p20) target = $region8
  $region5: #{tpu_custom_call.1} parent=0 // loop_body
    %s24 = ssub.s32 %s19, 1
    %s25 = ssub.s32 %s19, 2
    %s26 = sadd.s32 %s19, 1
    %s27 = ssub.s32 %s19, %s26
    %p28 = scmp.eq.s32.totalorder %s27, 0
    %s30 = sadd.s32 %s29, 1
    %s31 = scalar_select %p28, %s29, %s30
    %p34 = pneg %p28
    %p35 = scmp.eq.s32.totalorder %s19, 6
    %p36 = por %p34, %p35
    %p37 = scmp.ne.s32.totalorder %s29, %s32
    %p38 = scmp.eq.s32.totalorder %s19, 0
    %p39 = por %p37, %p38
    %p40 = scmp.ne.s32.totalorder %s29, %s32
    %p41 = scmp.eq.s32.totalorder %s24, 6
    %p42 = por %p40, %p41
    %p43 = scmp.ne.s32.totalorder %s32, %s33
    %p44 = scmp.eq.s32.totalorder %s24, 0
    %p45 = por %p43, %p44
    %p46 = scmp.ne.s32.totalorder %s32, %s33
    %p47 = scmp.eq.s32.totalorder %s25, 6
    %p48 = por %p46, %p47
    %p50 = scmp.ne.s32.totalorder %s33, %s49
    %p51 = scmp.eq.s32.totalorder %s25, 0
    %p52 = por %p50, %p51
    %s53 = ssub.s32 %s19, %s26
    %p54 = scmp.eq.s32.totalorder %s53, 0
    %s56 = sadd.s32 %s55, 1
    %s57 = scalar_select %p54, %s55, %s56
    %p60 = pneg %p54
    %p61 = scmp.eq.s32.totalorder %s19, 6
    %p62 = por %p60, %p61
    %p63 = scmp.ne.s32.totalorder %s55, %s58
    %p64 = scmp.eq.s32.totalorder %s19, 0
    %p65 = por %p63, %p64
    %p66 = scmp.ne.s32.totalorder %s55, %s58
    %p67 = scmp.eq.s32.totalorder %s24, 6
    %p68 = por %p66, %p67
    %p69 = scmp.ne.s32.totalorder %s58, %s59
    %p70 = scmp.eq.s32.totalorder %s24, 0
    %p71 = por %p69, %p70
    %p72 = scmp.ne.s32.totalorder %s58, %s59
    %p73 = scmp.eq.s32.totalorder %s25, 6
    %p74 = por %p72, %p73
    %p76 = scmp.ne.s32.totalorder %s59, %s75
    %p77 = scmp.eq.s32.totalorder %s25, 0
    %p78 = por %p76, %p77
    %s79 = ssub.s32 %s19, %s26
    %p80 = scmp.eq.s32.totalorder %s79, 0
    %s82 = sadd.s32 %s81, 1
    %s83 = scalar_select %p80, %s81, %s82
    %p86 = pneg %p80
    %p87 = scmp.eq.s32.totalorder %s19, 6
    %p88 = por %p86, %p87
    %p89 = scmp.ne.s32.totalorder %s81, %s84
    %p90 = scmp.eq.s32.totalorder %s19, 0
    %p91 = por %p89, %p90
    %p92 = scmp.ne.s32.totalorder %s81, %s84
    %p93 = scmp.eq.s32.totalorder %s24, 6
    %p94 = por %p92, %p93
    %p95 = scmp.ne.s32.totalorder %s84, %s85
    %p96 = scmp.eq.s32.totalorder %s24, 0
    %p97 = por %p95, %p96
    %p98 = scmp.ne.s32.totalorder %s84, %s85
    %p99 = scmp.eq.s32.totalorder %s25, 6
    %p100 = por %p98, %p99
    %p102 = scmp.ne.s32.totalorder %s85, %s101
    %p103 = scmp.eq.s32.totalorder %s25, 0
    %p104 = por %p102, %p103
    %s105 = ssub.s32 %s19, %s26
    %p106 = scmp.eq.s32.totalorder %s105, 0
    %s108 = sadd.s32 %s107, 1
    %s109 = scalar_select %p106, %s107, %s108
    %p112 = pneg %p106
    %p113 = scmp.eq.s32.totalorder %s19, 6
    %p114 = por %p112, %p113
    %p115 = scmp.ne.s32.totalorder %s107, %s110
    %p116 = scmp.eq.s32.totalorder %s19, 0
    %p117 = por %p115, %p116
    %p118 = scmp.ne.s32.totalorder %s107, %s110
    %p119 = scmp.eq.s32.totalorder %s24, 6
    %p120 = por %p118, %p119
    %p121 = scmp.ne.s32.totalorder %s110, %s111
    %p122 = scmp.eq.s32.totalorder %s24, 0
    %p123 = por %p121, %p122
    %p124 = scmp.ne.s32.totalorder %s110, %s111
    %p125 = scmp.eq.s32.totalorder %s25, 6
    %p126 = por %p124, %p125
    %p128 = scmp.ne.s32.totalorder %s111, %s127
    %p129 = scmp.eq.s32.totalorder %s25, 0
    %p130 = por %p128, %p129
    %s132 = sadd.s32 %s131, 1
    %p135 = scmp.eq.s32.totalorder %s19, 6
    %p136 = scmp.ne.s32.totalorder %s131, %s133
    %p137 = scmp.eq.s32.totalorder %s19, 0
    %p138 = por %p136, %p137
    %p139 = scmp.ne.s32.totalorder %s131, %s133
    %p140 = scmp.eq.s32.totalorder %s24, 6
    %p141 = por %p139, %p140
    %p142 = scmp.ne.s32.totalorder %s133, %s134
    %p143 = scmp.eq.s32.totalorder %s24, 0
    %p144 = por %p142, %p143
    %p145 = scmp.ne.s32.totalorder %s133, %s134
    %p146 = scmp.eq.s32.totalorder %s25, 6
    %p147 = por %p145, %p146
    %p149 = scmp.ne.s32.totalorder %s134, %s148
    %p150 = scmp.eq.s32.totalorder %s25, 0
    %p151 = por %p149, %p150
    %s153 = sadd.s32 %s152, 1
    %p156 = scmp.eq.s32.totalorder %s19, 6
    %p157 = scmp.ne.s32.totalorder %s152, %s154
    %p158 = scmp.eq.s32.totalorder %s19, 0
    %p159 = por %p157, %p158
    %p160 = scmp.ne.s32.totalorder %s152, %s154
    %p161 = scmp.eq.s32.totalorder %s24, 6
    %p162 = por %p160, %p161
    %p163 = scmp.ne.s32.totalorder %s154, %s155
    %p164 = scmp.eq.s32.totalorder %s24, 0
    %p165 = por %p163, %p164
    %p166 = scmp.ne.s32.totalorder %s154, %s155
    %p167 = scmp.eq.s32.totalorder %s25, 6
    %p168 = por %p166, %p167
    %p170 = scmp.ne.s32.totalorder %s155, %s169
    %p171 = scmp.eq.s32.totalorder %s25, 0
    %p172 = por %p170, %p171
    %s174 = sadd.s32 %s173, 1
    %p177 = scmp.eq.s32.totalorder %s19, 6
    %p178 = scmp.ne.s32.totalorder %s173, %s175
    %p179 = scmp.eq.s32.totalorder %s19, 0
    %p180 = por %p178, %p179
    %p181 = scmp.ne.s32.totalorder %s173, %s175
    %p182 = scmp.eq.s32.totalorder %s24, 6
    %p183 = por %p181, %p182
    %p184 = scmp.ne.s32.totalorder %s175, %s176
    %p185 = scmp.eq.s32.totalorder %s24, 0
    %p186 = por %p184, %p185
    %p187 = scmp.ne.s32.totalorder %s175, %s176
    %p188 = scmp.eq.s32.totalorder %s25, 6
    %p189 = por %p187, %p188
    %p191 = scmp.ne.s32.totalorder %s176, %s190
    %p192 = scmp.eq.s32.totalorder %s25, 0
    %p193 = por %p191, %p192
    %s195 = sadd.s32 %s194, 1
    %p198 = scmp.eq.s32.totalorder %s19, 6
    %p199 = scmp.ne.s32.totalorder %s194, %s196
    %p200 = scmp.eq.s32.totalorder %s19, 0
    %p201 = por %p199, %p200
    %p202 = scmp.ne.s32.totalorder %s194, %s196
    %p203 = scmp.eq.s32.totalorder %s24, 6
    %p204 = por %p202, %p203
    %p205 = scmp.ne.s32.totalorder %s196, %s197
    %p206 = scmp.eq.s32.totalorder %s24, 0
    %p207 = por %p205, %p206
    %p208 = scmp.ne.s32.totalorder %s196, %s197
    %p209 = scmp.eq.s32.totalorder %s25, 6
    %p210 = por %p208, %p209
    %p212 = scmp.ne.s32.totalorder %s197, %s211
    %p213 = scmp.eq.s32.totalorder %s25, 0
    %p214 = por %p212, %p213
    %s216 = sadd.s32 %s215, 1
    %p219 = scmp.eq.s32.totalorder %s19, 6
    %p220 = scmp.ne.s32.totalorder %s215, %s217
    %p221 = scmp.eq.s32.totalorder %s19, 0
    %p222 = por %p220, %p221
    %p223 = scmp.ne.s32.totalorder %s215, %s217
    %p224 = scmp.eq.s32.totalorder %s24, 6
    %p225 = por %p223, %p224
    %p226 = scmp.ne.s32.totalorder %s217, %s218
    %p227 = scmp.eq.s32.totalorder %s24, 0
    %p228 = por %p226, %p227
    %p229 = scmp.ne.s32.totalorder %s217, %s218
    %p230 = scmp.eq.s32.totalorder %s25, 6
    %p231 = por %p229, %p230
    %p233 = scmp.ne.s32.totalorder %s218, %s232
    %p234 = scmp.eq.s32.totalorder %s25, 0
    %p235 = por %p233, %p234
    %s237 = sadd.s32 %s236, 1
    %p240 = scmp.eq.s32.totalorder %s19, 6
    %p241 = scmp.ne.s32.totalorder %s236, %s238
    %p242 = scmp.eq.s32.totalorder %s19, 0
    %p243 = por %p241, %p242
    %p244 = scmp.ne.s32.totalorder %s236, %s238
    %p245 = scmp.eq.s32.totalorder %s24, 6
    %p246 = por %p244, %p245
    %p247 = scmp.ne.s32.totalorder %s238, %s239
    %p248 = scmp.eq.s32.totalorder %s24, 0
    %p249 = por %p247, %p248
    %p250 = scmp.ne.s32.totalorder %s238, %s239
    %p251 = scmp.eq.s32.totalorder %s25, 6
    %p252 = por %p250, %p251
    %p254 = scmp.ne.s32.totalorder %s239, %s253
    %p255 = scmp.eq.s32.totalorder %s25, 0
    %p256 = por %p254, %p255
    %s258 = sadd.s32 %s257, 1
    %p261 = scmp.eq.s32.totalorder %s19, 6
    %p262 = scmp.ne.s32.totalorder %s257, %s259
    %p263 = scmp.eq.s32.totalorder %s19, 0
    %p264 = por %p262, %p263
    %p265 = scmp.ne.s32.totalorder %s257, %s259
    %p266 = scmp.eq.s32.totalorder %s24, 6
    %p267 = por %p265, %p266
    %p268 = scmp.ne.s32.totalorder %s259, %s260
    %p269 = scmp.eq.s32.totalorder %s24, 0
    %p270 = por %p268, %p269
    %p271 = scmp.ne.s32.totalorder %s259, %s260
    %p272 = scmp.eq.s32.totalorder %s25, 6
    %p273 = por %p271, %p272
    %p275 = scmp.ne.s32.totalorder %s260, %s274
    %p276 = scmp.eq.s32.totalorder %s25, 0
    %p277 = por %p275, %p276
    %s279 = sadd.s32 %s278, 1
    %p282 = scmp.eq.s32.totalorder %s19, 6
    %p283 = scmp.ne.s32.totalorder %s278, %s280
    %p284 = scmp.eq.s32.totalorder %s19, 0
    %p285 = por %p283, %p284
    %p286 = scmp.ne.s32.totalorder %s278, %s280
    %p287 = scmp.eq.s32.totalorder %s24, 6
    %p288 = por %p286, %p287
    %p289 = scmp.ne.s32.totalorder %s280, %s281
    %p290 = scmp.eq.s32.totalorder %s24, 0
    %p291 = por %p289, %p290
    %p292 = scmp.ne.s32.totalorder %s280, %s281
    %p293 = scmp.eq.s32.totalorder %s25, 6
    %p294 = por %p292, %p293
    %p296 = scmp.ne.s32.totalorder %s281, %s295
    %p297 = scmp.eq.s32.totalorder %s25, 0
    %p298 = por %p296, %p297
    %s300 = sadd.s32 %s299, 1
    %p303 = scmp.eq.s32.totalorder %s19, 6
    %p304 = scmp.ne.s32.totalorder %s299, %s301
    %p305 = scmp.eq.s32.totalorder %s19, 0
    %p306 = por %p304, %p305
    %p307 = scmp.ne.s32.totalorder %s299, %s301
    %p308 = scmp.eq.s32.totalorder %s24, 6
    %p309 = por %p307, %p308
    %p310 = scmp.ne.s32.totalorder %s301, %s302
    %p311 = scmp.eq.s32.totalorder %s24, 0
    %p312 = por %p310, %p311
    %p313 = scmp.ne.s32.totalorder %s301, %s302
    %p314 = scmp.eq.s32.totalorder %s25, 6
    %p315 = por %p313, %p314
    %p317 = scmp.ne.s32.totalorder %s302, %s316
    %p318 = scmp.eq.s32.totalorder %s25, 0
    %p319 = por %p317, %p318
    %s320 = ssub.s32 %s19, %s26
    %p321 = scmp.eq.s32.totalorder %s320, 0
    %s323 = sadd.s32 %s322, 1
    %s324 = scalar_select %p321, %s322, %s323
    %p327 = pneg %p321
    %p328 = scmp.eq.s32.totalorder %s19, 6
    %p329 = por %p327, %p328
    %p330 = scmp.ne.s32.totalorder %s322, %s325
    %p331 = scmp.eq.s32.totalorder %s19, 0
    %p332 = por %p330, %p331
    %p333 = scmp.ne.s32.totalorder %s322, %s325
    %p334 = scmp.eq.s32.totalorder %s24, 6
    %p335 = por %p333, %p334
    %p336 = scmp.ne.s32.totalorder %s325, %s326
    %p337 = scmp.eq.s32.totalorder %s24, 0
    %p338 = por %p336, %p337
    %p339 = scmp.ne.s32.totalorder %s325, %s326
    %p340 = scmp.eq.s32.totalorder %s25, 6
    %p341 = por %p339, %p340
    %p343 = scmp.ne.s32.totalorder %s326, %s342
    %p344 = scmp.eq.s32.totalorder %s25, 0
    %p345 = por %p343, %p344
    %p346 = scmp.le.s32.totalorder 1, %s19
    %p347 = scmp.lt.s32.totalorder %s19, 8
    %p348 = pnand %p346, %p347
    %p349 = pneg %p348
    // Predicated region
    $region9: #{tpu_custom_call.1} parent=5 // pred_check
      _
    $region10: #{tpu_custom_call.1} parent=5 // pred_check_branch
      %351 = sbr.rel (%p348) target = $region12
    $region11: #{tpu_custom_call.1} parent=5 // pred_region
      %s352 = ssub.s32 %s19, 1
      // Predicated region
      $region13: #{tpu_custom_call.1} parent=11 // pred_check
        %p353 = pneg %p144
      $region14: #{tpu_custom_call.1} parent=11 // pred_check_branch
        %355 = sbr.rel (%p353) target = $region16
      $region15: #{tpu_custom_call.1} parent=11 // pred_region
        _
      $region16: #{tpu_custom_call.1} parent=11 // pred_fallthru
        _
      // Predicated region
      $region17: #{tpu_custom_call.1} parent=11 // pred_check
        %p356 = pneg %p165
      $region18: #{tpu_custom_call.1} parent=11 // pred_check_branch
        %358 = sbr.rel (%p356) target = $region20
      $region19: #{tpu_custom_call.1} parent=11 // pred_region
        _
      $region20: #{tpu_custom_call.1} parent=11 // pred_fallthru
        _
      // Predicated region
      $region21: #{tpu_custom_call.1} parent=11 // pred_check
        %p359 = pneg %p186
      $region22: #{tpu_custom_call.1} parent=11 // pred_check_branch
        %361 = sbr.rel (%p359) target = $region24
      $region23: #{tpu_custom_call.1} parent=11 // pred_region
        _
      $region24: #{tpu_custom_call.1} parent=11 // pred_fallthru
        _
      // Predicated region
      $region25: #{tpu_custom_call.1} parent=11 // pred_check
        %p362 = pneg %p207
      $region26: #{tpu_custom_call.1} parent=11 // pred_check_branch
        %364 = sbr.rel (%p362) target = $region28
      $region27: #{tpu_custom_call.1} parent=11 // pred_region
        _
      $region28: #{tpu_custom_call.1} parent=11 // pred_fallthru
        _
      // Predicated region
      $region29: #{tpu_custom_call.1} parent=11 // pred_check
        %p365 = pneg %p228
      $region30: #{tpu_custom_call.1} parent=11 // pred_check_branch
        %367 = sbr.rel (%p365) target = $region32
      $region31: #{tpu_custom_call.1} parent=11 // pred_region
        _
      $region32: #{tpu_custom_call.1} parent=11 // pred_fallthru
        _
      // Predicated region
      $region33: #{tpu_custom_call.1} parent=11 // pred_check
        %p368 = pneg %p249
      $region34: #{tpu_custom_call.1} parent=11 // pred_check_branch
        %370 = sbr.rel (%p368) target = $region36
      $region35: #{tpu_custom_call.1} parent=11 // pred_region
        _
      $region36: #{tpu_custom_call.1} parent=11 // pred_fallthru
        _
      // Predicated region
      $region37: #{tpu_custom_call.1} parent=11 // pred_check
        %p371 = pneg %p270
      $region38: #{tpu_custom_call.1} parent=11 // pred_check_branch
        %373 = sbr.rel (%p371) target = $region40
      $region39: #{tpu_custom_call.1} parent=11 // pred_region
        _
      $region40: #{tpu_custom_call.1} parent=11 // pred_fallthru
        _
      // Predicated region
      $region41: #{tpu_custom_call.1} parent=11 // pred_check
        %p374 = pneg %p291
      $region42: #{tpu_custom_call.1} parent=11 // pred_check_branch
        %376 = sbr.rel (%p374) target = $region44
      $region43: #{tpu_custom_call.1} parent=11 // pred_region
        _
      $region44: #{tpu_custom_call.1} parent=11 // pred_fallthru
        _
      // Predicated region
      $region45: #{tpu_custom_call.1} parent=11 // pred_check
        %p377 = pneg %p312
      $region46: #{tpu_custom_call.1} parent=11 // pred_check_branch
        %379 = sbr.rel (%p377) target = $region48
      $region47: #{tpu_custom_call.1} parent=11 // pred_region
        _
      $region48: #{tpu_custom_call.1} parent=11 // pred_fallthru
        _
    $region12: #{tpu_custom_call.1} parent=5 // pred_fallthru
      _
    %p380 = scmp.lt.s32.totalorder %s19, 7
    // Predicated region
    $region49: #{tpu_custom_call.1} parent=5 // pred_check
      %p381 = pneg %p380
    $region50: #{tpu_custom_call.1} parent=5 // pred_check_branch
      %383 = sbr.rel (%p381) target = $region52
    $region51: #{tpu_custom_call.1} parent=5 // pred_region
      // Predicated region
      $region53: #{tpu_custom_call.1} parent=51 // pred_check
        %p384 = pneg %p39
      $region54: #{tpu_custom_call.1} parent=51 // pred_check_branch
        %386 = sbr.rel (%p384) target = $region56
      $region55: #{tpu_custom_call.1} parent=51 // pred_region
        %s387 = smul.u32 4, %s19
        %p388 = scmp.lt.s32.totalorder %s387, 27
        %s389 = scalar_select %p388, %s387, 27
        %s390 = smul.addr %s389, 8
        %s391 = scalar_lea.vmem %s0, %s390
        %s392 = smul.u32 4, %s19
      $region56: #{tpu_custom_call.1} parent=51 // pred_fallthru
        _
      // Predicated region
      $region57: #{tpu_custom_call.1} parent=51 // pred_check
        %p393 = pneg %p65
      $region58: #{tpu_custom_call.1} parent=51 // pred_check_branch
        %395 = sbr.rel (%p393) target = $region60
      $region59: #{tpu_custom_call.1} parent=51 // pred_region
        %s396 = smul.u32 4, %s19
        %p397 = scmp.lt.s32.totalorder %s396, 27
        %s398 = scalar_select %p397, %s396, 27
        %s399 = smul.addr %s398, 8
        %s400 = scalar_lea.vmem %s1, %s399
        %s401 = smul.u32 4, %s19
      $region60: #{tpu_custom_call.1} parent=51 // pred_fallthru
        _
      // Predicated region
      $region61: #{tpu_custom_call.1} parent=51 // pred_check
        %p402 = pneg %p91
      $region62: #{tpu_custom_call.1} parent=51 // pred_check_branch
        %404 = sbr.rel (%p402) target = $region64
      $region63: #{tpu_custom_call.1} parent=51 // pred_region
        %s405 = smul.u32 4, %s19
        %p406 = scmp.lt.s32.totalorder %s405, 27
        %s407 = scalar_select %p406, %s405, 27
        %s408 = smul.addr %s407, 8
        %s409 = scalar_lea.vmem %s2, %s408
        %s410 = smul.u32 4, %s19
      $region64: #{tpu_custom_call.1} parent=51 // pred_fallthru
        _
      // Predicated region
      $region65: #{tpu_custom_call.1} parent=51 // pred_check
        %p411 = pneg %p117
      $region66: #{tpu_custom_call.1} parent=51 // pred_check_branch
        %413 = sbr.rel (%p411) target = $region68
      $region67: #{tpu_custom_call.1} parent=51 // pred_region
        %s414 = smul.u32 4, %s19
        %p415 = scmp.lt.s32.totalorder %s414, 27
        %s416 = scalar_select %p415, %s414, 27
        %s417 = smul.addr %s416, 8
        %s418 = scalar_lea.vmem %s3, %s417
        %s419 = smul.u32 4, %s19
      $region68: #{tpu_custom_call.1} parent=51 // pred_fallthru
        _
    $region52: #{tpu_custom_call.1} parent=5 // pred_fallthru
      _
    %p420 = scmp.le.s32.totalorder 1, %s19
    %p421 = scmp.lt.s32.totalorder %s19, 8
    %p422 = pnand %p420, %p421
    %p423 = pneg %p422
    // Predicated region
    $region69: #{tpu_custom_call.1} parent=5 // pred_check
      _
    $region70: #{tpu_custom_call.1} parent=5 // pred_check_branch
      %425 = sbr.rel (%p422) target = $region72
    $region71: #{tpu_custom_call.1} parent=5 // pred_region
      %s426 = ssub.s32 %s19, 1
      %s427 = smul.u32 4, %s24
      %p428 = scmp.lt.s32.totalorder %s427, 27
      %s429 = scalar_select %p428, %s427, 27
      %s430 = smul.addr %s429, 8
      %s431 = scalar_lea.vmem %s0, %s430
      %p432 = pneg %p45
      %p433 = pneg %p42
      %s434 = smul.u32 4, %s24
      %p435 = scmp.lt.s32.totalorder %s434, 27
      %s436 = scalar_select %p435, %s434, 27
      %s437 = smul.addr %s436, 8
      %s438 = scalar_lea.vmem %s1, %s437
      %p439 = pneg %p71
      %p440 = pneg %p68
      %s441 = smul.u32 4, %s24
      %p442 = scmp.lt.s32.totalorder %s441, 27
      %s443 = scalar_select %p442, %s441, 27
      %s444 = smul.addr %s443, 8
      %s445 = scalar_lea.vmem %s2, %s444
      %p446 = pneg %p97
      %p447 = pneg %p94
      %s448 = smul.u32 4, %s24
      %p449 = scmp.lt.s32.totalorder %s448, 27
      %s450 = scalar_select %p449, %s448, 27
      %s451 = smul.addr %s450, 8
      %s452 = scalar_lea.vmem %s3, %s451
      %p453 = pneg %p123
      %p454 = pneg %p120
      %p455 = pneg %p144
      %p456 = pneg %p141
      %p457 = pneg %p165
      %p458 = pneg %p162
      %p459 = pneg %p186
      %p460 = pneg %p183
      %p461 = pneg %p207
      %p462 = pneg %p204
      %p463 = pneg %p228
      %p464 = pneg %p225
      %p465 = pneg %p249
      %p466 = pneg %p246
      %p467 = pneg %p270
      %p468 = pneg %p267
      %p469 = pneg %p291
      %p470 = pneg %p288
      %p471 = pneg %p312
      %p472 = pneg %p309
      %p473 = pneg %p338
      %p474 = pneg %p335
      %s475 = smul.u32 4, %s24
      %p476 = scmp.lt.s32.totalorder %s475, 27
      %s477 = scalar_select %p476, %s475, 27
      %s478 = smul.addr %s477, 8
      %s479 = scalar_lea.vmem %s13, %s478
      %s480 = smul.u32 4, %s24
      %p481 = scmp.lt.s32.totalorder %s480, 27
      %s482 = scalar_select %p481, %s480, 27
      %s483 = smul.addr %s482, 8
      %s484 = scalar_lea.vmem %s0, %s483
      %s485 = smul.u32 4, %s24
      %s486 = smul.u32 4, %s24
      %p487 = scmp.lt.s32.totalorder %s486, 27
      %s488 = scalar_select %p487, %s486, 27
      %s489 = smul.addr %s488, 8
      %s490 = scalar_lea.vmem %s1, %s489
      %s491 = smul.u32 4, %s24
      %s492 = smul.u32 4, %s24
      %p493 = scmp.lt.s32.totalorder %s492, 27
      %s494 = scalar_select %p493, %s492, 27
      %s495 = smul.addr %s494, 8
      %s496 = scalar_lea.vmem %s2, %s495
      %s497 = smul.u32 4, %s24
      %s498 = smul.u32 4, %s24
      %p499 = scmp.lt.s32.totalorder %s498, 27
      %s500 = scalar_select %p499, %s498, 27
      %s501 = smul.addr %s500, 8
      %s502 = scalar_lea.vmem %s3, %s501
      %s503 = smul.u32 4, %s24
      %s504 = smul.u32 4, %s24
      %p505 = scmp.lt.s32.totalorder %s504, 27
      %s506 = scalar_select %p505, %s504, 27
      %s507 = smul.addr %s506, 8
      %s508 = scalar_lea.vmem %s13, %s507
      %s509 = smul.u32 4, %s24
      %v510 = vld [vmem:[%s484] sm:$0xff]
      %v511 = vld [vmem:[%s484 + $0x8] sm:$0xff]
      %v512 = vld [vmem:[%s484 + $0x10] sm:$0xff]
      %v513 = vld [vmem:[%s484 + $0x18] sm:$0xff]
      %v514 = vld [vmem:[%s490] sm:$0xff]
      %v515 = vld [vmem:[%s490 + $0x8] sm:$0xff]
      %v516 = vld [vmem:[%s490 + $0x10] sm:$0xff]
      %v517 = vld [vmem:[%s490 + $0x18] sm:$0xff]
      %v518 = vld [vmem:[%s4] sm:$0xff]
      %v519 = vld [vmem:[%s4 + $0x8] sm:$0xff]
      %v520 = vld [vmem:[%s4 + $0x10] sm:$0xff]
      %v521 = vld [vmem:[%s4 + $0x18] sm:$0xff]
      %v522 = vld [vmem:[%s5] sm:$0xff]
      %v523 = vld [vmem:[%s5 + $0x8] sm:$0xff]
      %v524 = vld [vmem:[%s5 + $0x10] sm:$0xff]
      %vm525 = vcmask 195584
      %v527 = vsel %vm525, %v514, 0
      %v530 = vsel %vm525, %v515, 0
      %v533 = vsel %vm525, %v516, 0
      %v536 = vsel %vm525, %v517, 0
      %538 = vmatpush.msra.mxu0 0.0
      %539 = vmatpush.msra.mxu0 0.0
      %540 = vmatpush.msra.mxu0 0.0
      %541 = vmatpush.msra.mxu0 0.0
      %542 = vmatpush.msra.mxu0 0.0
      %543 = vmatpush.msra.mxu0 0.0
      %544 = vmatpush.msra.mxu0 0.0
      %545 = vmatpush.msra.mxu0 0.0
      %546 = vmatpush.msra.mxu0 0.0
      %547 = vmatpush.msra.mxu0 0.0
      %548 = vmatpush.msra.mxu0 0.0
      %549 = vmatpush.msra.mxu0 0.0
      %550 = vmatpush.msra.mxu0 0.0
      %551 = vmatpush.msra.mxu0 %v524
      %552 = vmatpush.msra.mxu0 %v523
      %553 = vmatpush.msra.mxu0 %v522
      %554 = vmatmul.f32.gmra.mxu0 %v527
      %v555 = vpop.f32.mrf.mxu0
      %v556 = vadd.f32 0.0, %v555
      %557 = vmatmul.f32.gmra.mxu0 %v530
      %v558 = vpop.f32.mrf.mxu0
      %v559 = vadd.f32 0.0, %v558
      %560 = vmatmul.f32.gmra.mxu0 %v533
      %v561 = vpop.f32.mrf.mxu0
      %v562 = vadd.f32 0.0, %v561
      %563 = vmatmul.f32.gmra.mxu0 %v536
      %v564 = vpop.f32.mrf.mxu0
      %v565 = vadd.f32 0.0, %v564
      %566 = vdwg.mxu0
      %vm567 = vcmask 261120
      %v569 = vsel %vm567, %v510, 0
      %v572 = vsel %vm567, %v511, 0
      %v575 = vsel %vm567, %v512, 0
      %v578 = vsel %vm567, %v513, 0
      %580 = vmatpush.msra.mxu0 0.0
      %581 = vmatpush.msra.mxu0 0.0
      %582 = vmatpush.msra.mxu0 0.0
      %583 = vmatpush.msra.mxu0 0.0
      %584 = vmatpush.msra.mxu0 0.0
      %585 = vmatpush.msra.mxu0 0.0
      %586 = vmatpush.msra.mxu0 0.0
      %587 = vmatpush.msra.mxu0 0.0
      %588 = vmatpush.msra.mxu0 0.0
      %589 = vmatpush.msra.mxu0 0.0
      %590 = vmatpush.msra.mxu0 0.0
      %591 = vmatpush.msra.mxu0 0.0
      %592 = vmatpush.msra.mxu0 %v521
      %593 = vmatpush.msra.mxu0 %v520
      %594 = vmatpush.msra.mxu0 %v519
      %595 = vmatpush.msra.mxu0 %v518
      %596 = vmatmul.f32.gmra.mxu0 %v569
      %v597 = vpop.f32.mrf.mxu0
      %v598 = vadd.f32 %v556, %v597
      %599 = vmatmul.f32.gmra.mxu0 %v572
      %v600 = vpop.f32.mrf.mxu0
      %v601 = vadd.f32 %v559, %v600
      %602 = vmatmul.f32.gmra.mxu0 %v575
      %v603 = vpop.f32.mrf.mxu0
      %v604 = vadd.f32 %v562, %v603
      %605 = vmatmul.f32.gmra.mxu0 %v578
      %v606 = vpop.f32.mrf.mxu0
      %v607 = vadd.f32 %v565, %v606
      %608 = vdwg.mxu0
      %v609 = vld [vmem:[%s6] sm:$0x1]
      %v611 = vperm.slane %v609, 0
      %v613 = vadd.f32 %v598, %v611
      %v614 = vadd.f32 %v601, %v611
      %v615 = vadd.f32 %v604, %v611
      %v616 = vadd.f32 %v607, %v611
      %621 = vrot.lane.b32.xlu0 %v613, 105
      %v622 = vpop.permute.xlu0 %621
      %623 = vrot.lane.b32.xlu0 %v614, 105
      %v624 = vpop.permute.xlu0 %623
      %625 = vrot.lane.b32.xlu0 %v615, 105
      %v626 = vpop.permute.xlu0 %625
      %627 = vrot.lane.b32.xlu0 %v616, 105
      %v628 = vpop.permute.xlu0 %627
      %vm633 = vcmask 15368
      %634 = vst.msk [vmem:[%s508] sm:$0xff] %vm633, %v622
      %635 = vst.msk [vmem:[%s508 + $0x8] sm:$0xff] %vm633, %v624
      %636 = vst.msk [vmem:[%s508 + $0x10] sm:$0xff] %vm633, %v626
      %637 = vst.msk [vmem:[%s508 + $0x18] sm:$0xff] %vm633, %v628
      %v638 = vmax.f32 %v613, 0.0
      %v639 = vmax.f32 %v614, 0.0
      %v640 = vmax.f32 %v615, 0.0
      %v641 = vmax.f32 %v616, 0.0
      %v642 = vld [vmem:[%s496] sm:$0xff]
      %v643 = vld [vmem:[%s496 + $0x8] sm:$0xff]
      %v644 = vld [vmem:[%s496 + $0x10] sm:$0xff]
      %v645 = vld [vmem:[%s496 + $0x18] sm:$0xff]
      %v646 = vld [vmem:[%s7] sm:$0xff]
      %v647 = vld [vmem:[%s7 + $0x8] sm:$0xff]
      %v648 = vld [vmem:[%s7 + $0x10] sm:$0xff]
      %v649 = vld [vmem:[%s8] sm:$0xff]
      %v650 = vld [vmem:[%s8 + $0x8] sm:$0xff]
      %vm651 = vcmask 130048
      %v653 = vsel %vm651, %v642, 0
      %v656 = vsel %vm651, %v643, 0
      %v659 = vsel %vm651, %v644, 0
      %v662 = vsel %vm651, %v645, 0
      %664 = vmatpush.msra.mxu0 0.0
      %665 = vmatpush.msra.mxu0 0.0
      %666 = vmatpush.msra.mxu0 0.0
      %667 = vmatpush.msra.mxu0 0.0
      %668 = vmatpush.msra.mxu0 0.0
      %669 = vmatpush.msra.mxu0 0.0
      %670 = vmatpush.msra.mxu0 0.0
      %671 = vmatpush.msra.mxu0 0.0
      %672 = vmatpush.msra.mxu0 0.0
      %673 = vmatpush.msra.mxu0 0.0
      %674 = vmatpush.msra.mxu0 0.0
      %675 = vmatpush.msra.mxu0 0.0
      %676 = vmatpush.msra.mxu0 0.0
      %677 = vmatpush.msra.mxu0 0.0
      %678 = vmatpush.msra.mxu0 %v650
      %679 = vmatpush.msra.mxu0 %v649
      %680 = vmatmul.f32.gmra.mxu0 %v653
      %v681 = vpop.f32.mrf.mxu0
      %v682 = vadd.f32 0.0, %v681
      %683 = vmatmul.f32.gmra.mxu0 %v656
      %v684 = vpop.f32.mrf.mxu0
      %v685 = vadd.f32 0.0, %v684
      %686 = vmatmul.f32.gmra.mxu0 %v659
      %v687 = vpop.f32.mrf.mxu0
      %v688 = vadd.f32 0.0, %v687
      %689 = vmatmul.f32.gmra.mxu0 %v662
      %v690 = vpop.f32.mrf.mxu0
      %v691 = vadd.f32 0.0, %v690
      %692 = vdwg.mxu0
      %v694 = vsel %vm525, %v638, 0
      %v697 = vsel %vm525, %v639, 0
      %v700 = vsel %vm525, %v640, 0
      %v703 = vsel %vm525, %v641, 0
      %705 = vmatpush.msra.mxu0 0.0
      %706 = vmatpush.msra.mxu0 0.0
      %707 = vmatpush.msra.mxu0 0.0
      %708 = vmatpush.msra.mxu0 0.0
      %709 = vmatpush.msra.mxu0 0.0
      %710 = vmatpush.msra.mxu0 0.0
      %711 = vmatpush.msra.mxu0 0.0
      %712 = vmatpush.msra.mxu0 0.0
      %713 = vmatpush.msra.mxu0 0.0
      %714 = vmatpush.msra.mxu0 0.0
      %715 = vmatpush.msra.mxu0 0.0
      %716 = vmatpush.msra.mxu0 0.0
      %717 = vmatpush.msra.mxu0 0.0
      %718 = vmatpush.msra.mxu0 %v648
      %719 = vmatpush.msra.mxu0 %v647
      %720 = vmatpush.msra.mxu0 %v646
      %721 = vmatmul.f32.gmra.mxu0 %v694
      %v722 = vpop.f32.mrf.mxu0
      %v723 = vadd.f32 %v682, %v722
      %724 = vmatmul.f32.gmra.mxu0 %v697
      %v725 = vpop.f32.mrf.mxu0
      %v726 = vadd.f32 %v685, %v725
      %727 = vmatmul.f32.gmra.mxu0 %v700
      %v728 = vpop.f32.mrf.mxu0
      %v729 = vadd.f32 %v688, %v728
      %730 = vmatmul.f32.gmra.mxu0 %v703
      %v731 = vpop.f32.mrf.mxu0
      %v732 = vadd.f32 %v691, %v731
      %733 = vdwg.mxu0
      %v734 = vld [vmem:[%s9] sm:$0x1]
      %v736 = vperm.slane %v734, 0
      %v738 = vadd.f32 %v723, %v736
      %v739 = vadd.f32 %v726, %v736
      %v740 = vadd.f32 %v729, %v736
      %v741 = vadd.f32 %v732, %v736
      %746 = vrot.lane.b32.xlu0 %v738, 114
      %v747 = vpop.permute.xlu0 %746
      %748 = vrot.lane.b32.xlu0 %v739, 114
      %v749 = vpop.permute.xlu0 %748
      %750 = vrot.lane.b32.xlu0 %v740, 114
      %v751 = vpop.permute.xlu0 %750
      %752 = vrot.lane.b32.xlu0 %v741, 114
      %v753 = vpop.permute.xlu0 %752
      %vm758 = vcmask 23568
      %759 = vst.msk [vmem:[%s508] sm:$0xff] %vm758, %v747
      %760 = vst.msk [vmem:[%s508 + $0x8] sm:$0xff] %vm758, %v749
      %761 = vst.msk [vmem:[%s508 + $0x10] sm:$0xff] %vm758, %v751
      %762 = vst.msk [vmem:[%s508 + $0x18] sm:$0xff] %vm758, %v753
      %v763 = vmax.f32 %v738, 0.0
      %v764 = vmax.f32 %v739, 0.0
      %v765 = vmax.f32 %v740, 0.0
      %v766 = vmax.f32 %v741, 0.0
      %v767 = vld [vmem:[%s502] sm:$0xff]
      %v768 = vld [vmem:[%s502 + $0x8] sm:$0xff]
      %v769 = vld [vmem:[%s502 + $0x10] sm:$0xff]
      %v770 = vld [vmem:[%s502 + $0x18] sm:$0xff]
      %v771 = vld [vmem:[%s10] sm:$0xff]
      %v772 = vld [vmem:[%s10 + $0x8] sm:$0xff]
      %v773 = vld [vmem:[%s11] sm:$0xff]
      %v774 = vld [vmem:[%s11 + $0x8] sm:$0xff]
      %v776 = vsel %vm651, %v767, 0
      %v779 = vsel %vm651, %v768, 0
      %v782 = vsel %vm651, %v769, 0
      %v785 = vsel %vm651, %v770, 0
      %787 = vmatpush.msra.mxu0 0.0
      %788 = vmatpush.msra.mxu0 0.0
      %789 = vmatpush.msra.mxu0 0.0
      %790 = vmatpush.msra.mxu0 0.0
      %791 = vmatpush.msra.mxu0 0.0
      %792 = vmatpush.msra.mxu0 0.0
      %793 = vmatpush.msra.mxu0 0.0
      %794 = vmatpush.msra.mxu0 0.0
      %795 = vmatpush.msra.mxu0 0.0
      %796 = vmatpush.msra.mxu0 0.0
      %797 = vmatpush.msra.mxu0 0.0
      %798 = vmatpush.msra.mxu0 0.0
      %799 = vmatpush.msra.mxu0 0.0
      %800 = vmatpush.msra.mxu0 0.0
      %801 = vmatpush.msra.mxu0 %v774
      %802 = vmatpush.msra.mxu0 %v773
      %803 = vmatmul.f32.gmra.mxu0 %v776
      %v804 = vpop.f32.mrf.mxu0
      %v805 = vadd.f32 0.0, %v804
      %806 = vmatmul.f32.gmra.mxu0 %v779
      %v807 = vpop.f32.mrf.mxu0
      %v808 = vadd.f32 0.0, %v807
      %809 = vmatmul.f32.gmra.mxu0 %v782
      %v810 = vpop.f32.mrf.mxu0
      %v811 = vadd.f32 0.0, %v810
      %812 = vmatmul.f32.gmra.mxu0 %v785
      %v813 = vpop.f32.mrf.mxu0
      %v814 = vadd.f32 0.0, %v813
      %815 = vdwg.mxu0
      %v817 = vsel %vm651, %v763, 0
      %v820 = vsel %vm651, %v764, 0
      %v823 = vsel %vm651, %v765, 0
      %v826 = vsel %vm651, %v766, 0
      %828 = vmatpush.msra.mxu0 0.0
      %829 = vmatpush.msra.mxu0 0.0
      %830 = vmatpush.msra.mxu0 0.0
      %831 = vmatpush.msra.mxu0 0.0
      %832 = vmatpush.msra.mxu0 0.0
      %833 = vmatpush.msra.mxu0 0.0
      %834 = vmatpush.msra.mxu0 0.0
      %835 = vmatpush.msra.mxu0 0.0
      %836 = vmatpush.msra.mxu0 0.0
      %837 = vmatpush.msra.mxu0 0.0
      %838 = vmatpush.msra.mxu0 0.0
      %839 = vmatpush.msra.mxu0 0.0
      %840 = vmatpush.msra.mxu0 0.0
      %841 = vmatpush.msra.mxu0 0.0
      %842 = vmatpush.msra.mxu0 %v772
      %843 = vmatpush.msra.mxu0 %v771
      %844 = vmatmul.f32.gmra.mxu0 %v817
      %v845 = vpop.f32.mrf.mxu0
      %v846 = vadd.f32 %v805, %v845
      %847 = vmatmul.f32.gmra.mxu0 %v820
      %v848 = vpop.f32.mrf.mxu0
      %v849 = vadd.f32 %v808, %v848
      %850 = vmatmul.f32.gmra.mxu0 %v823
      %v851 = vpop.f32.mrf.mxu0
      %v852 = vadd.f32 %v811, %v851
      %853 = vmatmul.f32.gmra.mxu0 %v826
      %v854 = vpop.f32.mrf.mxu0
      %v855 = vadd.f32 %v814, %v854
      %856 = vdwg.mxu0
      %v857 = vld [vmem:[%s12] sm:$0x1]
      %v859 = vperm.slane %v857, 0
      %v861 = vadd.f32 %v846, %v859
      %v862 = vadd.f32 %v849, %v859
      %v863 = vadd.f32 %v852, %v859
      %v864 = vadd.f32 %v855, %v859
      %869 = vrot.lane.b32.xlu0 %v861, 2
      %v870 = vpop.permute.xlu0 %869
      %871 = vrot.lane.b32.xlu0 %v862, 2
      %v872 = vpop.permute.xlu0 %871
      %873 = vrot.lane.b32.xlu0 %v863, 2
      %v874 = vpop.permute.xlu0 %873
      %875 = vrot.lane.b32.xlu0 %v864, 2
      %v876 = vpop.permute.xlu0 %875
      %vm881 = vcmask 31768
      %882 = vst.msk [vmem:[%s508] sm:$0xff] %vm881, %v870
      %883 = vst.msk [vmem:[%s508 + $0x8] sm:$0xff] %vm881, %v872
      %884 = vst.msk [vmem:[%s508 + $0x10] sm:$0xff] %vm881, %v874
      %885 = vst.msk [vmem:[%s508 + $0x18] sm:$0xff] %vm881, %v876
      %v886 = vmax.f32 %v861, 0.0
      %v887 = vmax.f32 %v862, 0.0
      %v888 = vmax.f32 %v863, 0.0
      %v889 = vmax.f32 %v864, 0.0
      %vm890 = vcmask 7168
      %891 = vst.msk [vmem:[%s508] sm:$0xff] %vm890, %v886
      %892 = vst.msk [vmem:[%s508 + $0x8] sm:$0xff] %vm890, %v887
      %893 = vst.msk [vmem:[%s508 + $0x10] sm:$0xff] %vm890, %v888
      %894 = vst.msk [vmem:[%s508 + $0x18] sm:$0xff] %vm890, %v889
      %s895 = smul.u32 4, %s24
      %p896 = scmp.lt.s32.totalorder %s895, 27
      %s897 = scalar_select %p896, %s895, 27
      %s898 = smul.addr %s897, 8
      %s899 = scalar_lea.vmem %s13, %s898
      // Predicated region
      $region73: #{tpu_custom_call.1} parent=71 // pred_check
        %p900 = pneg %p335
      $region74: #{tpu_custom_call.1} parent=71 // pred_check_branch
        %902 = sbr.rel (%p900) target = $region76
      $region75: #{tpu_custom_call.1} parent=71 // pred_region
        %s903 = smul.u32 4, %s24
      $region76: #{tpu_custom_call.1} parent=71 // pred_fallthru
        _
    $region72: #{tpu_custom_call.1} parent=5 // pred_fallthru
      _
    %p904 = scmp.le.s32.totalorder 2, %s19
    // Predicated region
    $region77: #{tpu_custom_call.1} parent=5 // pred_check
      %p905 = pneg %p904
    $region78: #{tpu_custom_call.1} parent=5 // pred_check_branch
      %907 = sbr.rel (%p905) target = $region80
    $region79: #{tpu_custom_call.1} parent=5 // pred_region
      %s908 = ssub.s32 %s19, 2
      // Predicated region
      $region81: #{tpu_custom_call.1} parent=79 // pred_check
        %p909 = pneg %p341
      $region82: #{tpu_custom_call.1} parent=79 // pred_check_branch
        %911 = sbr.rel (%p909) target = $region84
      $region83: #{tpu_custom_call.1} parent=79 // pred_region
        %s912 = smul.u32 4, %s25
        %p913 = scmp.lt.s32.totalorder %s912, 27
        %s914 = scalar_select %p913, %s912, 27
        %s915 = smul.addr %s914, 8
        %s916 = scalar_lea.vmem %s13, %s915
      $region84: #{tpu_custom_call.1} parent=79 // pred_fallthru
        _
    $region80: #{tpu_custom_call.1} parent=5 // pred_fallthru
      _
  $region6: #{tpu_custom_call.1} parent=0 // loop_footer
    %s23 = sadd.s32 1, %s19
  $region7: #{tpu_custom_call.1} parent=0 // loop_footer_branch
    %18 = sbr.rel target = $region3
  $region8: #{tpu_custom_call.1} parent=0 // loop_exit
    _

</llo_original>
